<compile_context>
chip_gen: v5e
topology: v5e:2x2
jax: 0.10.0
libtpu: 0.0.40
codegen_flags: <defaults>
</compile_context>

<pallas_src>
import functools

import jax
import jax.numpy as jnp
from jax.experimental import pallas as pl
from jax.experimental.pallas import tpu as pltpu

IN_DIM, H1, H2, OUT_DIM = 300, 100, 50, 2
DEFAULT_TILE_B = 1024  # sweep 512/1024/2048; x double-buffer at 1024 rows ~ 2.4 MB f32


def _round_up(n, m):
    return ((n + m - 1) // m) * m


def mlp_kernel(x_ref, w1_ref, b1_ref, w2_ref, b2_ref, wd_ref, bd_ref, o_ref):
    # Cast x to bf16 in-kernel (input streamed as f32 straight from the caller).
    x = x_ref[...].astype(jnp.bfloat16)

    h1 = jnp.dot(x, w1_ref[...], preferred_element_type=jnp.float32) + b1_ref[...]
    h1 = jnp.maximum(h1, 0.0)

    h2 = jnp.dot(h1.astype(jnp.bfloat16), w2_ref[...],
                 preferred_element_type=jnp.float32) + b2_ref[...]
    h2 = jnp.maximum(h2, 0.0)

    # Layer 3 (50 -> 2) off the MXU + exact 2-class softmax:
    #   d = logit1 - logit0 = h2 @ (w3[:,1]-w3[:,0]) + (b3[1]-b3[0])
    #   p1 = sigmoid(d), p0 = 1 - p1   (rows sum to exactly 1)
    d = jnp.sum(h2 * wd_ref[...], axis=-1, keepdims=True) + bd_ref[...]
    p1 = 1.0 / (1.0 + jnp.exp(-d))
    p0 = 1.0 - p1

    # Assemble (tile, 2) output with a pure-VPU select (no lane concat).
    col = jax.lax.broadcasted_iota(jnp.int32, (d.shape[0], OUT_DIM), 1)
    o_ref[...] = jnp.where(col == 0, p0, p1).astype(o_ref.dtype)


@functools.partial(jax.jit, static_argnames=("tile_b",))
def net_forward(x, params, *, tile_b=DEFAULT_TILE_B):
    """x: (B, 300) float32. params: (in,out)-layout weights, (1,out) biases (f32)."""
    B = x.shape[0]

    # Batch tile: multiple of 8, capped at tile_b, and capped near B/2 so the grid
    # has >= 2 steps whenever possible (keeps both v7x TensorCores busy).
    half = _round_up(-(-B // 2), 8)
    eff_tile = max(8, min(tile_b, half))
    grid = (pl.cdiv(B, eff_tile),)

    w1 = params["w1"].astype(jnp.bfloat16)
    w2 = params["w2"].astype(jnp.bfloat16)
    b1, b2 = params["b1"], params["b2"]
    # Fold layer 3 + softmax into a logit-difference vector / scalar (f32, tiny).
    wd = (params["w3"][:, 1] - params["w3"][:, 0]).reshape(1, H2)
    bd = (params["b3"][:, 1] - params["b3"][:, 0]).reshape(1, 1)

    # Weights/biases: same block every step -> loaded once, resident in VMEM.
    resident = lambda shape: pl.BlockSpec(shape, lambda i: (0,) * len(shape))

    weight_bytes = 2 * (IN_DIM * H1 + H1 * H2) + 4 * (H1 + H2 + H2 + 1)
    cost = pl.CostEstimate(
        flops=2 * B * (IN_DIM * H1 + H1 * H2 + H2),
        transcendentals=B,
        bytes_accessed=B * IN_DIM * 4 + B * OUT_DIM * 4 + weight_bytes,
    )

    out = pl.pallas_call(
        mlp_kernel,
        out_shape=jax.ShapeDtypeStruct((B, OUT_DIM), jnp.float32),
        grid=grid,
        in_specs=[
            pl.BlockSpec((eff_tile, IN_DIM), lambda i: (i, 0)),  # x streamed f32
            resident((IN_DIM, H1)), resident((1, H1)),
            resident((H1, H2)),     resident((1, H2)),
            resident((1, H2)),      resident((1, 1)),
        ],
        out_specs=pl.BlockSpec((eff_tile, OUT_DIM), lambda i: (i, 0)),
        compiler_params=pltpu.CompilerParams(
            dimension_semantics=("parallel",),
            vmem_limit_bytes=32 * 1024 * 1024,
        ),
        cost_estimate=cost,
    )(x, w1, b1, w2, b2, wd, bd)

    return out


def init_params(key):
    """Deterministic synthetic params matching nn.Linear fan-in init.

    PyTorch stores W as (out, in); we store the transpose (in, out) so the
    kernel computes x @ W_t + b.
    """
    ks = jax.random.split(key, 6)
    s1 = 1.0 / jnp.sqrt(IN_DIM)
    s2 = 1.0 / jnp.sqrt(H1)
    s3 = 1.0 / jnp.sqrt(H2)
    return {
        "w1": jax.random.uniform(ks[0], (IN_DIM, H1), jnp.float32, -s1, s1),
        "b1": jax.random.uniform(ks[1], (1, H1), jnp.float32, -s1, s1),
        "w2": jax.random.uniform(ks[2], (H1, H2), jnp.float32, -s2, s2),
        "b2": jax.random.uniform(ks[3], (1, H2), jnp.float32, -s2, s2),
        "w3": jax.random.uniform(ks[4], (H2, OUT_DIM), jnp.float32, -s3, s3),
        "b3": jax.random.uniform(ks[5], (1, OUT_DIM), jnp.float32, -s3, s3),
    }


def reference_forward(x, params):
    h1 = jax.nn.relu(x @ params["w1"] + params["b1"])
    h2 = jax.nn.relu(h1 @ params["w2"] + params["b2"])
    return jax.nn.softmax(h2 @ params["w3"] + params["b3"], axis=-1)


if __name__ == "__main__":
    key = jax.random.PRNGKey(0)
    k_x, k_p = jax.random.split(key)
    params = init_params(k_p)

    # Test 1: small batch (single grid step).
    B = 8
    x = jax.random.normal(k_x, (B, IN_DIM), jnp.float32)
    out = jax.block_until_ready(net_forward(x, params))
    ref = reference_forward(x, params)
    assert out.shape == (B, OUT_DIM)
    # bf16 MXU operands -> loosened tolerance vs f32 reference.
    assert jnp.allclose(out, ref, atol=3e-2, rtol=3e-2)
    # Sigmoid-form softmax: rows sum to (numerically) exactly 1.
    assert jnp.allclose(jnp.sum(out, axis=-1), 1.0, atol=1e-5)

    # Test 2: batch not divisible by the tile -> multi-step grid + masked
    # partial last block (no wrapper-side padding).
    B2 = 40
    x2 = jax.random.normal(jax.random.fold_in(k_x, 1), (B2, IN_DIM), jnp.float32)
    out2 = jax.block_until_ready(net_forward(x2, params, tile_b=16))
    ref2 = reference_forward(x2, params)
    assert out2.shape == (B2, OUT_DIM)
    assert jnp.allclose(out2, ref2, atol=3e-2, rtol=3e-2)
    assert jnp.allclose(jnp.sum(out2, axis=-1), 1.0, atol=1e-5)

    print("KERNEL_OK")
</pallas_src>

<mosaic_0001>
module attributes {stable_mosaic.version = 11 : i64} {
  func.func @mlp_kernel(%arg0: i32, %arg1: memref<8x300xf32, #tpu.memory_space<vmem>>, %arg2: memref<300x100xbf16, #tpu.memory_space<vmem>>, %arg3: memref<1x100xf32, #tpu.memory_space<vmem>>, %arg4: memref<100x50xbf16, #tpu.memory_space<vmem>>, %arg5: memref<1x50xf32, #tpu.memory_space<vmem>>, %arg6: memref<1x50xf32, #tpu.memory_space<vmem>>, %arg7: memref<1x1xf32, #tpu.memory_space<vmem>>, %arg8: memref<8x2xf32, #tpu.memory_space<vmem>>) attributes {dimension_semantics = [#tpu.dimension_semantics<parallel>], iteration_bounds = array<i64: 1>, scalar_prefetch = 0 : i64, scratch_operands = 0 : i64, tpu.core_type = #tpu.core_type<tc>, window_params = [{transform_indices = @transform_0, window_bounds = array<i64: 8, 300>}, {pipeline_mode = #tpu.pipeline_mode<synchronous>, transform_indices = @transform_1, window_bounds = array<i64: 300, 100>}, {pipeline_mode = #tpu.pipeline_mode<synchronous>, transform_indices = @transform_2, window_bounds = array<i64: 1, 100>}, {pipeline_mode = #tpu.pipeline_mode<synchronous>, transform_indices = @transform_3, window_bounds = array<i64: 100, 50>}, {pipeline_mode = #tpu.pipeline_mode<synchronous>, transform_indices = @transform_4, window_bounds = array<i64: 1, 50>}, {pipeline_mode = #tpu.pipeline_mode<synchronous>, transform_indices = @transform_5, window_bounds = array<i64: 1, 50>}, {pipeline_mode = #tpu.pipeline_mode<synchronous>, transform_indices = @transform_6, window_bounds = array<i64: 1, 1>}, {transform_indices = @transform_7, window_bounds = array<i64: 8, 2>}]} {
    %c0 = arith.constant 0 : index
    %c0_0 = arith.constant 0 : index
    %0 = vector.load %arg1[%c0, %c0_0] : memref<8x300xf32, #tpu.memory_space<vmem>>, vector<8x300xf32>
    %1 = arith.truncf %0 : vector<8x300xf32> to vector<8x300xbf16>
    %c0_1 = arith.constant 0 : index
    %c0_2 = arith.constant 0 : index
    %2 = vector.load %arg2[%c0_1, %c0_2] : memref<300x100xbf16, #tpu.memory_space<vmem>>, vector<300x100xbf16>
    %cst = arith.constant dense<0.000000e+00> : vector<8x100xf32>
    %3 = tpu.matmul %1, %2, %cst {dimension_numbers = #tpu.dot_dimension_numbers<[1], [0], [0], [1], [0, 0, 1, 1], [], []>} : vector<8x300xbf16>, vector<300x100xbf16>, vector<8x100xf32> -> vector<8x100xf32>
    %c0_3 = arith.constant 0 : index
    %c0_4 = arith.constant 0 : index
    %4 = vector.load %arg3[%c0_3, %c0_4] : memref<1x100xf32, #tpu.memory_space<vmem>>, vector<1x100xf32>
    %5 = vector.broadcast %4 : vector<1x100xf32> to vector<8x100xf32>
    %6 = arith.addf %3, %5 : vector<8x100xf32>
    %cst_5 = arith.constant 0.000000e+00 : f32
    %7 = vector.broadcast %cst_5 : f32 to vector<8x100xf32>
    %8 = arith.maximumf %6, %7 : vector<8x100xf32>
    %9 = arith.truncf %8 : vector<8x100xf32> to vector<8x100xbf16>
    %c0_6 = arith.constant 0 : index
    %c0_7 = arith.constant 0 : index
    %10 = vector.load %arg4[%c0_6, %c0_7] : memref<100x50xbf16, #tpu.memory_space<vmem>>, vector<100x50xbf16>
    %cst_8 = arith.constant dense<0.000000e+00> : vector<8x50xf32>
    %11 = tpu.matmul %9, %10, %cst_8 {dimension_numbers = #tpu.dot_dimension_numbers<[1], [0], [0], [1], [0, 0, 1, 1], [], []>} : vector<8x100xbf16>, vector<100x50xbf16>, vector<8x50xf32> -> vector<8x50xf32>
    %c0_9 = arith.constant 0 : index
    %c0_10 = arith.constant 0 : index
    %12 = vector.load %arg5[%c0_9, %c0_10] : memref<1x50xf32, #tpu.memory_space<vmem>>, vector<1x50xf32>
    %13 = vector.broadcast %12 : vector<1x50xf32> to vector<8x50xf32>
    %14 = arith.addf %11, %13 : vector<8x50xf32>
    %cst_11 = arith.constant 0.000000e+00 : f32
    %15 = vector.broadcast %cst_11 : f32 to vector<8x50xf32>
    %16 = arith.maximumf %14, %15 : vector<8x50xf32>
    %c0_12 = arith.constant 0 : index
    %c0_13 = arith.constant 0 : index
    %17 = vector.load %arg6[%c0_12, %c0_13] : memref<1x50xf32, #tpu.memory_space<vmem>>, vector<1x50xf32>
    %18 = vector.broadcast %17 : vector<1x50xf32> to vector<8x50xf32>
    %19 = arith.mulf %16, %18 : vector<8x50xf32>
    %cst_14 = arith.constant dense<0.000000e+00> : vector<8xf32>
    %20 = vector.multi_reduction <add>, %19, %cst_14 [1] : vector<8x50xf32> to vector<8xf32>
    %21 = vector.shape_cast %20 : vector<8xf32> to vector<8x1xf32>
    %c0_15 = arith.constant 0 : index
    %c0_16 = arith.constant 0 : index
    %22 = vector.load %arg7[%c0_15, %c0_16] : memref<1x1xf32, #tpu.memory_space<vmem>>, vector<1x1xf32>
    %23 = vector.broadcast %22 : vector<1x1xf32> to vector<8x1xf32>
    %24 = arith.addf %21, %23 : vector<8x1xf32>
    %cst_17 = arith.constant 0.000000e+00 : f32
    %25 = vector.broadcast %cst_17 : f32 to vector<8x1xf32>
    %26 = arith.subf %25, %24 : vector<8x1xf32>
    %27 = math.exp %26 : vector<8x1xf32>
    %cst_18 = arith.constant 1.000000e+00 : f32
    %28 = vector.broadcast %cst_18 : f32 to vector<8x1xf32>
    %29 = arith.addf %28, %27 : vector<8x1xf32>
    %cst_19 = arith.constant 1.000000e+00 : f32
    %30 = vector.broadcast %cst_19 : f32 to vector<8x1xf32>
    %31 = arith.divf %30, %29 : vector<8x1xf32>
    %cst_20 = arith.constant 1.000000e+00 : f32
    %32 = vector.broadcast %cst_20 : f32 to vector<8x1xf32>
    %33 = arith.subf %32, %31 : vector<8x1xf32>
    %34 = tpu.iota {dimensions = array<i32: 1>} : vector<8x2xi32>
    %c0_i32 = arith.constant 0 : i32
    %35 = vector.broadcast %c0_i32 : i32 to vector<8x2xi32>
    %36 = arith.cmpi eq, %34, %35 : vector<8x2xi32>
    %37 = vector.shape_cast %33 : vector<8x1xf32> to vector<8x1xf32>
    %38 = vector.broadcast %37 : vector<8x1xf32> to vector<8x2xf32>
    %39 = vector.shape_cast %31 : vector<8x1xf32> to vector<8x1xf32>
    %40 = vector.broadcast %39 : vector<8x1xf32> to vector<8x2xf32>
    %41 = arith.select %36, %38, %40 : vector<8x2xi1>, vector<8x2xf32>
    %c0_21 = arith.constant 0 : index
    %c0_22 = arith.constant 0 : index
    %42 = vector.load %arg8[%c0_21, %c0_22] : memref<8x2xf32, #tpu.memory_space<vmem>>, vector<8x2xf32>
    tpu.vector_store %arg8[%c0_21, %c0_22], %41 {strides = array<i32>} : memref<8x2xf32, #tpu.memory_space<vmem>>, vector<8x2xf32>,
    return
  }
  func.func @transform_0(%arg0: i32) -> (i32, i32) {
    %c0_i32 = arith.constant 0 : i32
    %c0_i32_0 = arith.constant 0 : i32
    return %arg0, %c0_i32 : i32, i32
  }
  func.func @transform_1(%arg0: i32) -> (i32, i32) {
    %c0_i32 = arith.constant 0 : i32
    %c0_i32_0 = arith.constant 0 : i32
    %c0_i32_1 = arith.constant 0 : i32
    return %c0_i32, %c0_i32_0 : i32, i32
  }
  func.func @transform_2(%arg0: i32) -> (i32, i32) {
    %c0_i32 = arith.constant 0 : i32
    %c0_i32_0 = arith.constant 0 : i32
    %c0_i32_1 = arith.constant 0 : i32
    return %c0_i32, %c0_i32_0 : i32, i32
  }
  func.func @transform_3(%arg0: i32) -> (i32, i32) {
    %c0_i32 = arith.constant 0 : i32
    %c0_i32_0 = arith.constant 0 : i32
    %c0_i32_1 = arith.constant 0 : i32
    return %c0_i32, %c0_i32_0 : i32, i32
  }
  func.func @transform_4(%arg0: i32) -> (i32, i32) {
    %c0_i32 = arith.constant 0 : i32
    %c0_i32_0 = arith.constant 0 : i32
    %c0_i32_1 = arith.constant 0 : i32
    return %c0_i32, %c0_i32_0 : i32, i32
  }
  func.func @transform_5(%arg0: i32) -> (i32, i32) {
    %c0_i32 = arith.constant 0 : i32
    %c0_i32_0 = arith.constant 0 : i32
    %c0_i32_1 = arith.constant 0 : i32
    return %c0_i32, %c0_i32_0 : i32, i32
  }
  func.func @transform_6(%arg0: i32) -> (i32, i32) {
    %c0_i32 = arith.constant 0 : i32
    %c0_i32_0 = arith.constant 0 : i32
    %c0_i32_1 = arith.constant 0 : i32
    return %c0_i32, %c0_i32_0 : i32, i32
  }
  func.func @transform_7(%arg0: i32) -> (i32, i32) {
    %c0_i32 = arith.constant 0 : i32
    %c0_i32_0 = arith.constant 0 : i32
    return %arg0, %c0_i32 : i32, i32
  }
}

</mosaic_0001>

<llo_original>
// kernel: net_forward.1
$region0: #{net_forward.1}
  #allocation0 [shape = 'u32[]', space=smem, size = 0x4, offset = 0x4, fixed_abs, tag = 'smem constant byte address 0x4 - core index']
  #allocation1 [shape = 'u32[72,128]{1,0:T(1,128)}', space=vmem, size = 0x9000, scoped, tag = 'internal scratch']
  #allocation2 [shape = 'f32[1,1]{1,0:T(1,128)S(1)}', space=vmem, size = 0x200, scoped, tag = 'scoped memory for net_forward.1']
  %s0 = inlined_call_operand.vmem [shape: f32[8,300], index: 0, kind: input, shape index: {}]
  %s1 = inlined_call_operand.vmem [shape: bf16[300,100], index: 1, kind: input, shape index: {}]
  %s2 = inlined_call_operand.vmem [shape: f32[1,100], index: 2, kind: input, shape index: {}]
  %s3 = inlined_call_operand.vmem [shape: bf16[100,50], index: 3, kind: input, shape index: {}]
  %s4 = inlined_call_operand.vmem [shape: f32[1,50], index: 4, kind: input, shape index: {}]
  %s5 = inlined_call_operand.vmem [shape: f32[1,50], index: 5, kind: input, shape index: {}]
  %s6 = inlined_call_operand.<no memory space> [shape: f32[1,1], index: 6, kind: input, shape index: {}]
  %s7 = inlined_call_operand.vmem [shape: f32[8,2], index: 7, kind: output, shape index: {}]
  %s8 = sld [smem:[#allocation0]]
  $region38: #{net_forward.1} parent=0
    _
  %s10 = ssub.s32 1, %s8
  %s11 = scalar_select 0, %s10, %s8
  %v12 = vstv %s6
  %13 = vst [vmem:[#allocation2] sm:$0x1] %v12
  // Predicated region
  $region2: #{net_forward.1} parent=0 // pred_check
    _
  $region3: #{net_forward.1} parent=0 // pred_check_branch
    %15 = sbr.rel (0) target = $region5
  $region4: #{net_forward.1} parent=0 // pred_region
    _
  $region5: #{net_forward.1} parent=0 // pred_fallthru
    _
  // Predicated region
  $region6: #{net_forward.1} parent=0 // pred_check
    _
  $region7: #{net_forward.1} parent=0 // pred_check_branch
    %17 = sbr.rel (0) target = $region9
  $region8: #{net_forward.1} parent=0 // pred_region
    _
  $region9: #{net_forward.1} parent=0 // pred_fallthru
    _
  // Predicated region
  $region10: #{net_forward.1} parent=0 // pred_check
    _
  $region11: #{net_forward.1} parent=0 // pred_check_branch
    %19 = sbr.rel (0) target = $region13
  $region12: #{net_forward.1} parent=0 // pred_region
    _
  $region13: #{net_forward.1} parent=0 // pred_fallthru
    _
  // Predicated region
  $region14: #{net_forward.1} parent=0 // pred_check
    _
  $region15: #{net_forward.1} parent=0 // pred_check_branch
    %21 = sbr.rel (0) target = $region17
  $region16: #{net_forward.1} parent=0 // pred_region
    _
  $region17: #{net_forward.1} parent=0 // pred_fallthru
    _
  // Predicated region
  $region18: #{net_forward.1} parent=0 // pred_check
    _
  $region19: #{net_forward.1} parent=0 // pred_check_branch
    %23 = sbr.rel (0) target = $region21
  $region20: #{net_forward.1} parent=0 // pred_region
    _
  $region21: #{net_forward.1} parent=0 // pred_fallthru
    _
  // Predicated region
  $region22: #{net_forward.1} parent=0 // pred_check
    _
  $region23: #{net_forward.1} parent=0 // pred_check_branch
    %25 = sbr.rel (0) target = $region25
  $region24: #{net_forward.1} parent=0 // pred_region
    _
  $region25: #{net_forward.1} parent=0 // pred_fallthru
    _
  // Predicated region
  $region26: #{net_forward.1} parent=0 // pred_check
    _
  $region27: #{net_forward.1} parent=0 // pred_check_branch
    %27 = sbr.rel (0) target = $region29
  $region28: #{net_forward.1} parent=0 // pred_region
    _
  $region29: #{net_forward.1} parent=0 // pred_fallthru
    _
  %v29 = vld [vmem:[%s0] sm:$0xff]
  %v30 = vld [vmem:[%s0 + $0x8] sm:$0xff]
  %v31 = vld [vmem:[%s0 + $0x10] sm:$0xff]
  %v32 = vpack.c.bf16 %v29, %v29
  %v33 = vpack.c.bf16 %v30, %v30
  %v34 = vpack.c.bf16 %v31, %v31
  %v35 = vld [vmem:[%s1] sm:$0xf]
  %v36 = vld [vmem:[%s1 + $0x4] sm:$0xf]
  %v37 = vld [vmem:[%s1 + $0x8] sm:$0xf]
  %v38 = vld [vmem:[%s1 + $0xc] sm:$0xf]
  %v39 = vld [vmem:[%s1 + $0x10] sm:$0xf]
  %v40 = vld [vmem:[%s1 + $0x14] sm:$0xf]
  %v41 = vld [vmem:[%s1 + $0x18] sm:$0xf]
  %v42 = vld [vmem:[%s1 + $0x1c] sm:$0xf]
  %v43 = vld [vmem:[%s1 + $0x20] sm:$0xf]
  %v44 = vld [vmem:[%s1 + $0x24] sm:$0xf]
  %v45 = vld [vmem:[%s1 + $0x28] sm:$0xf]
  %v46 = vld [vmem:[%s1 + $0x2c] sm:$0xf]
  %v47 = vld [vmem:[%s1 + $0x30] sm:$0xf]
  %v48 = vld [vmem:[%s1 + $0x34] sm:$0xf]
  %v49 = vld [vmem:[%s1 + $0x38] sm:$0xf]
  %v50 = vld [vmem:[%s1 + $0x3c] sm:$0xf]
  %v51 = vld [vmem:[%s1 + $0x40] sm:$0xf]
  %v52 = vld [vmem:[%s1 + $0x44] sm:$0xf]
  %v53 = vld [vmem:[%s1 + $0x48] sm:$0xf]
  %v54 = vld [vmem:[%s1 + $0x4c] sm:$0xf]
  %v55 = vld [vmem:[%s1 + $0x50] sm:$0xf]
  %v56 = vld [vmem:[%s1 + $0x54] sm:$0xf]
  %v57 = vld [vmem:[%s1 + $0x58] sm:$0xf]
  %v58 = vld [vmem:[%s1 + $0x5c] sm:$0xf]
  %v59 = vld [vmem:[%s1 + $0x60] sm:$0xf]
  %v60 = vld [vmem:[%s1 + $0x64] sm:$0xf]
  %v61 = vld [vmem:[%s1 + $0x68] sm:$0xf]
  %v62 = vld [vmem:[%s1 + $0x6c] sm:$0xf]
  %v63 = vld [vmem:[%s1 + $0x70] sm:$0xf]
  %v64 = vld [vmem:[%s1 + $0x74] sm:$0xf]
  %v65 = vld [vmem:[%s1 + $0x78] sm:$0xf]
  %v66 = vld [vmem:[%s1 + $0x7c] sm:$0xf]
  %v67 = vld [vmem:[%s1 + $0x80] sm:$0xf]
  %v68 = vld [vmem:[%s1 + $0x84] sm:$0xf]
  %v69 = vld [vmem:[%s1 + $0x88] sm:$0xf]
  %v70 = vld [vmem:[%s1 + $0x8c] sm:$0xf]
  %v71 = vld [vmem:[%s1 + $0x90] sm:$0xf]
  %v72 = vld [vmem:[%s1 + $0x94] sm:$0x3]
  %v73 = vld [vmem:[%s2] sm:$0x1]
  %v75 = vperm.slane %v73, 0
  %v115 = vunpack.c.l.b16 %v35
  %v116 = vunpack.c.l.b16 %v36
  %v117 = vunpack.c.l.b16 %v37
  %v118 = vunpack.c.l.b16 %v38
  %v119 = vunpack.c.l.b16 %v39
  %v120 = vunpack.c.l.b16 %v40
  %v121 = vunpack.c.l.b16 %v41
  %v122 = vunpack.c.l.b16 %v42
  %v123 = vunpack.c.l.b16 %v43
  %v124 = vunpack.c.l.b16 %v44
  %v125 = vunpack.c.l.b16 %v45
  %v126 = vunpack.c.l.b16 %v46
  %v127 = vunpack.c.l.b16 %v47
  %v128 = vunpack.c.l.b16 %v48
  %v129 = vunpack.c.l.b16 %v49
  %v130 = vunpack.c.l.b16 %v50
  %v131 = vunpack.c.l.b16 %v51
  %v132 = vunpack.c.l.b16 %v52
  %v133 = vunpack.c.l.b16 %v53
  %v134 = vunpack.c.l.b16 %v54
  %v135 = vunpack.c.l.b16 %v55
  %v136 = vunpack.c.l.b16 %v56
  %v137 = vunpack.c.l.b16 %v57
  %v138 = vunpack.c.l.b16 %v58
  %v139 = vunpack.c.l.b16 %v59
  %v140 = vunpack.c.l.b16 %v60
  %v141 = vunpack.c.l.b16 %v61
  %v142 = vunpack.c.l.b16 %v62
  %v143 = vunpack.c.l.b16 %v63
  %v144 = vunpack.c.l.b16 %v64
  %v145 = vunpack.c.l.b16 %v65
  %v146 = vunpack.c.l.b16 %v66
  %v147 = vunpack.c.l.b16 %v67
  %v148 = vunpack.c.l.b16 %v68
  %v149 = vunpack.c.l.b16 %v69
  %v150 = vunpack.c.l.b16 %v70
  %v151 = vunpack.c.l.b16 %v71
  %v152 = vunpack.c.l.b16 %v72
  %v153 = vpack.c.b16 %v116, %v115
  %v154 = vpack.c.b16 %v118, %v117
  %v155 = vpack.c.b16 %v120, %v119
  %v156 = vpack.c.b16 %v122, %v121
  %v157 = vpack.c.b16 %v124, %v123
  %v158 = vpack.c.b16 %v126, %v125
  %v159 = vpack.c.b16 %v128, %v127
  %v160 = vpack.c.b16 %v130, %v129
  %v161 = vpack.c.b16 %v132, %v131
  %v162 = vpack.c.b16 %v134, %v133
  %v163 = vpack.c.b16 %v136, %v135
  %v164 = vpack.c.b16 %v138, %v137
  %v165 = vpack.c.b16 %v140, %v139
  %v166 = vpack.c.b16 %v142, %v141
  %v167 = vpack.c.b16 %v144, %v143
  %v168 = vpack.c.b16 %v146, %v145
  %v169 = vpack.c.b16 %v148, %v147
  %v170 = vpack.c.b16 %v150, %v149
  %v171 = vpack.c.b16 %v152, %v151
  %vm190 = vcmask 359424
  %v192 = vsel %vm190, %v34, 0
  %vm194 = vcmask 1045504
  %v196 = vsel %vm194, %v171, 0
  %198 = vmatpush.bf16.msra.mxu0 %v160
  %199 = vmatpush.bf16.msra.mxu0 %v159
  %200 = vmatpush.bf16.msra.mxu0 %v158
  %201 = vmatpush.bf16.msra.mxu0 %v157
  %202 = vmatpush.bf16.msra.mxu0 %v156
  %203 = vmatpush.bf16.msra.mxu0 %v155
  %204 = vmatpush.bf16.msra.mxu0 %v154
  %205 = vmatpush.bf16.msra.mxu0 %v153
  %206 = vmatmul.bf16.gmra.mxu0 %v32
  %v207 = vpop.f32.mrf.mxu0
  %v208 = vadd.f32 %v75, %v207
  %v209 = vpop.f32.mrf.mxu0
  %210 = vdwg.mxu0
  %211 = vmatpush.bf16.msra.mxu0 %v168
  %212 = vmatpush.bf16.msra.mxu0 %v167
  %213 = vmatpush.bf16.msra.mxu0 %v166
  %214 = vmatpush.bf16.msra.mxu0 %v165
  %215 = vmatpush.bf16.msra.mxu0 %v164
  %216 = vmatpush.bf16.msra.mxu0 %v163
  %217 = vmatpush.bf16.msra.mxu0 %v162
  %218 = vmatpush.bf16.msra.mxu0 %v161
  %219 = vmatmul.bf16.gmra.mxu0 %v33
  %v220 = vpop.f32.mrf.mxu0
  %v221 = vadd.f32 %v208, %v220
  %v222 = vpop.f32.mrf.mxu0
  %223 = vdwg.mxu0
  %224 = vmatpush.bf16.msra.mxu0 0
  %225 = vmatpush.bf16.msra.mxu0 0
  %226 = vmatpush.bf16.msra.mxu0 0
  %227 = vmatpush.bf16.msra.mxu0 0
  %228 = vmatpush.bf16.msra.mxu0 0
  %229 = vmatpush.bf16.msra.mxu0 %v196
  %230 = vmatpush.bf16.msra.mxu0 %v170
  %231 = vmatpush.bf16.msra.mxu0 %v169
  %232 = vmatmul.bf16.gmra.mxu0 %v192
  %v233 = vpop.f32.mrf.mxu0
  %v234 = vadd.f32 %v221, %v233
  %v235 = vpop.f32.mrf.mxu0
  %236 = vdwg.mxu0
  %v237 = vmax.f32 %v234, 0.0
  %v238 = vpack.c.bf16 %v237, %v237
  %v239 = vld [vmem:[%s3] sm:$0xf]
  %v240 = vld [vmem:[%s3 + $0x4] sm:$0xf]
  %v241 = vld [vmem:[%s3 + $0x8] sm:$0xf]
  %v242 = vld [vmem:[%s3 + $0xc] sm:$0xf]
  %v243 = vld [vmem:[%s3 + $0x10] sm:$0xf]
  %v244 = vld [vmem:[%s3 + $0x14] sm:$0xf]
  %v245 = vld [vmem:[%s3 + $0x18] sm:$0xf]
  %v246 = vld [vmem:[%s3 + $0x1c] sm:$0xf]
  %v247 = vld [vmem:[%s3 + $0x20] sm:$0xf]
  %v248 = vld [vmem:[%s3 + $0x24] sm:$0xf]
  %v249 = vld [vmem:[%s3 + $0x28] sm:$0xf]
  %v250 = vld [vmem:[%s3 + $0x2c] sm:$0xf]
  %v251 = vld [vmem:[%s3 + $0x30] sm:$0x3]
  %v252 = vld [vmem:[%s4] sm:$0x1]
  %v254 = vperm.slane %v252, 0
  %v269 = vunpack.c.l.b16 %v239
  %v270 = vunpack.c.l.b16 %v240
  %v271 = vunpack.c.l.b16 %v241
  %v272 = vunpack.c.l.b16 %v242
  %v273 = vunpack.c.l.b16 %v243
  %v274 = vunpack.c.l.b16 %v244
  %v275 = vunpack.c.l.b16 %v245
  %v276 = vunpack.c.l.b16 %v246
  %v277 = vunpack.c.l.b16 %v247
  %v278 = vunpack.c.l.b16 %v248
  %v279 = vunpack.c.l.b16 %v249
  %v280 = vunpack.c.l.b16 %v250
  %v281 = vunpack.c.l.b16 %v251
  %v282 = vpack.c.b16 %v270, %v269
  %v283 = vpack.c.b16 %v272, %v271
  %v284 = vpack.c.b16 %v274, %v273
  %v285 = vpack.c.b16 %v276, %v275
  %v286 = vpack.c.b16 %v278, %v277
  %v287 = vpack.c.b16 %v280, %v279
  %v288 = vpack.c.b16 %v281, %v281
  %vm295 = vcmask 818176
  %v297 = vsel %vm295, %v238, 0
  %vm299 = vcmask 1041408
  %v301 = vsel %vm299, %v288, 0
  %303 = vmatpush.bf16.msra.mxu0 0
  %304 = vmatpush.bf16.msra.mxu0 %v301
  %305 = vmatpush.bf16.msra.mxu0 %v287
  %306 = vmatpush.bf16.msra.mxu0 %v286
  %307 = vmatpush.bf16.msra.mxu0 %v285
  %308 = vmatpush.bf16.msra.mxu0 %v284
  %309 = vmatpush.bf16.msra.mxu0 %v283
  %310 = vmatpush.bf16.msra.mxu0 %v282
  %311 = vmatmul.bf16.gmra.mxu0 %v297
  %v312 = vpop.f32.mrf.mxu0
  %v313 = vadd.f32 %v254, %v312
  %v314 = vpop.f32.mrf.mxu0
  %315 = vdwg.mxu0
  %v316 = vmax.f32 %v313, 0.0
  %v317 = vld [vmem:[%s5] sm:$0x1]
  %v319 = vperm.slane %v317, 0
  %v321 = vmul.f32 %v316, %v319
  %vm322 = vcmask 408576
  %v323 = vsel %vm322, %v321, 0.0
  %324 = vadd.xlane.f32.xlu0 %v323
  %v325 = vpop.xlane.xlu0 %324
  %v326 = vld [vmem:[#allocation2] sm:$0x1]
  %v328 = vperm.slane %v326, 0
  %v330 = vadd.f32 %v325, %v328
  %v331 = vsub.f32 0.0, %v330
  %v332 = vmul.f32 %v331, 1.442695
  %v333 = vpow.pop %v332
  %v334 = vadd.f32 %v333, 1.0
  %v335 = vrcp.pop %v334
  %v336 = vmul.f32 %v334, %v335
  %v337 = vsub.f32 1.0, %v336
  %v338 = vmul.f32 %v335, %v337
  %v339 = vadd.f32 %v335, %v338
  %vm340 = vweird.f32 %v334
  %vm341 = vweird.f32 %v335
  %vm342 = vmor %vm340, %vm341
  %v343 = vsel %vm342, %v335, %v339
  %v344 = vand.u32 2147483647, %v334
  %vm345 = vcmp.eq.f32.partialorder %v344, 8.507059e+37
  %v346 = vand.u32 %v334, 2147483648
  %v347 = vor.u32 1.1754944e-38, %v346
  %v348 = vsel %vm345, %v347, %v343
  %v349 = vmul.f32 1.0, %v348
  %v350 = vsub.f32 1.0, %v349
  %v351 = vlaneseq
  %v352 = vand.u32 %v351, 127
  %vm353 = vcmp.eq.s32.totalorder %v352, 0
  %355 = vset.pattern.permute.xlu0 0
  %356 = vperm.xlu0 %355, %v350
  %v357 = vpop.permute.xlu0 %356
  %360 = vset.pattern.permute.xlu0 0
  %361 = vperm.xlu0 %360, %v349
  %v362 = vpop.permute.xlu0 %361
  %v364 = vsel %vm353, %v357, %v362
  %vm365 = vcmask 15360
  %366 = vst.msk [vmem:[%s7] sm:$0xff] %vm365, %v364
  // Predicated region
  $region30: #{net_forward.1} parent=0 // pred_check
    _
  $region31: #{net_forward.1} parent=0 // pred_check_branch
    %368 = sbr.rel (0) target = $region33
  $region32: #{net_forward.1} parent=0 // pred_region
    _
  $region33: #{net_forward.1} parent=0 // pred_fallthru
    _
  // Predicated region
  $region34: #{net_forward.1} parent=0 // pred_check
    _
  $region35: #{net_forward.1} parent=0 // pred_check_branch
    %370 = sbr.rel (0) target = $region37
  $region36: #{net_forward.1} parent=0 // pred_region
    _
  $region37: #{net_forward.1} parent=0 // pred_fallthru
    _

</llo_original>
